<compile_context>
chip_gen: v7x
topology: tpu7x:2x2x1
jax: 0.10.0
libtpu: 0.0.40
codegen_flags: <defaults>
</compile_context>

<pallas_src>
import jax
import jax.numpy as jnp
from jax.experimental import pallas as pl
from jax.experimental.pallas import tpu as pltpu


# ----------------------------------------------------------------------------
# Pallas kernel: fused 1x1 channel mix over dense (rows, 128) spatial slabs.
# ----------------------------------------------------------------------------
def _make_channel_mix_kernel(c_in: int, c_out: int, acc_dtype=jnp.float32):
    def kernel(w_ref, b_ref, x_ref, o_ref):
        # w_ref: (c_out, c_in)          SMEM  (fused weight, scalar reads)
        # b_ref: (N, c_out)             SMEM  (per-batch fused bias)
        # x_ref: (c_in, tile_rows, 128) VMEM  (dense spatial slab per channel)
        # o_ref: (c_out, tile_rows, 128) VMEM
        n = pl.program_id(0)
        for co in range(c_out):
            acc = x_ref[0].astype(acc_dtype) * w_ref[co, 0]
            for ci in range(1, c_in):
                acc = acc + x_ref[ci].astype(acc_dtype) * w_ref[co, ci]
            o_ref[co] = (acc + b_ref[n, co]).astype(o_ref.dtype)

    return kernel


def _pick_row_tile(rows: int, n_batch: int, max_rows: int) -> int:
    """Row-tile (sublane count): large, multiple of 8 unless it covers all rows."""
    tile = min(rows, max_rows)
    # Give v7x's two TensorCores at least 2 grid programs when the image is big.
    if n_batch * ((rows + tile - 1) // tile) < 2 and rows >= 16:
        tile = max(8, (rows // 2 // 8) * 8)
    if tile < rows and tile % 8 != 0:
        tile = max(8, (tile // 8) * 8)
    return tile


def fused_channel_mix(x, w_fused, b_fused, *, max_tile_rows=2048, io_dtype=None):
    """x: (N, C_in, H, W); w_fused: (C_out, C_in); b_fused: (N, C_out)."""
    n, c_in, h, w = x.shape
    c_out = w_fused.shape[0]
    hw = h * w

    if io_dtype is not None:
        x = x.astype(io_dtype)
    out_dtype = x.dtype
    itemsize = jnp.dtype(out_dtype).itemsize

    # Repack spatial axis densely into (rows, 128): free reshape for contiguous NCHW.
    rows = -(-hw // 128)
    pad = rows * 128 - hw
    x_flat = x.reshape(n, c_in, hw)
    if pad:
        # TODO(synk): for HW not a multiple of 128 this single-row pad costs one
        # extra XLA pass; an in-kernel masked tail would avoid it.
        x_flat = jnp.pad(x_flat, ((0, 0), (0, 0), (0, pad)))
    x4 = x_flat.reshape(n, c_in, rows, 128)

    tile_rows = _pick_row_tile(rows, n, max_tile_rows)
    num_row_tiles = -(-rows // tile_rows)   # cdiv grid; partial tail is masked

    bytes_accessed = (c_in + c_out) * n * rows * 128 * itemsize
    flops = 2 * c_in * c_out * n * rows * 128

    out4 = pl.pallas_call(
        _make_channel_mix_kernel(c_in, c_out),
        out_shape=jax.ShapeDtypeStruct((n, c_out, rows, 128), out_dtype),
        grid=(n, num_row_tiles),
        in_specs=[
            pl.BlockSpec(memory_space=pltpu.MemorySpace.SMEM),   # fused 3x3 weight
            pl.BlockSpec(memory_space=pltpu.MemorySpace.SMEM),   # per-batch fused bias
            pl.BlockSpec((None, c_in, tile_rows, 128), lambda nb, rt: (nb, 0, rt, 0)),
        ],
        out_specs=pl.BlockSpec((None, c_out, tile_rows, 128),
                               lambda nb, rt: (nb, 0, rt, 0)),
        compiler_params=pltpu.CompilerParams(
            dimension_semantics=("parallel", "parallel"),   # megacore split on v7x
            vmem_limit_bytes=40 * 1024 * 1024,              # headroom under v7x 64 MiB
        ),
        cost_estimate=pl.CostEstimate(
            flops=flops, transcendentals=0, bytes_accessed=bytes_accessed),
    )(w_fused.astype(jnp.float32), b_fused.astype(jnp.float32), x4)

    out_flat = out4.reshape(n, c_out, rows * 128)
    if pad:
        out_flat = out_flat[:, :, :hw]
    return out_flat.reshape(n, c_out, h, w)


# ----------------------------------------------------------------------------
# ModifiedModel forward (synthetic base_model stand-in + real final_conv),
# with the two linear 1x1 convs folded at trace time.
# ----------------------------------------------------------------------------
def init_params(key, c_in=3, c_mid=6, c_out=3):
    ks = jax.random.split(key, 6)
    return {
        # TODO(synk): synthetic stand-in for the external UNet base_model.
        "base_w": jax.random.normal(ks[0], (c_mid, c_in), jnp.float32) * 0.3,
        "base_b": jax.random.normal(ks[1], (c_mid,), jnp.float32) * 0.1,
        "emb_w": jax.random.normal(ks[2], (c_mid,), jnp.float32) * 0.05,
        "emb_b": jax.random.normal(ks[3], (c_mid,), jnp.float32) * 0.05,
        # final_conv = nn.Conv2d(6, 3, kernel_size=1)
        "final_w": jax.random.normal(ks[4], (c_out, c_mid), jnp.float32) * 0.3,
        "final_b": jax.random.normal(ks[5], (c_out,), jnp.float32) * 0.1,
    }


@jax.jit
def modified_model_forward(x, t, params):
    """x: (N, 3, H, W) NCHW float32; t: (N,) timesteps."""
    t = t.astype(jnp.float32)

    # Per-batch time embedding of the synthetic base_model (added to each pixel).
    t_emb = t[:, None] * params["emb_w"][None, :] + params["emb_b"][None, :]      # (N, 6)

    # Trace-time algebraic fold: final(6->3) o base(3->6)  ==  one 3->3 mix.
    w_fused = params["final_w"] @ params["base_w"]                                 # (3, 3)
    b_fused = (params["base_b"][None, :] + t_emb) @ params["final_w"].T \
        + params["final_b"][None, :]                                               # (N, 3)

    return fused_channel_mix(x, w_fused, b_fused)


# Pure-JAX reference of the un-fused forward (base 1x1 conv + t_emb, then final_conv).
def modified_model_reference(x, t, params):
    t = t.astype(jnp.float32)
    t_emb = t[:, None] * params["emb_w"][None, :] + params["emb_b"][None, :]       # (N, 6)
    y = jnp.einsum("oc,nchw->nohw", params["base_w"], x)
    y = y + params["base_b"][None, :, None, None] + t_emb[:, :, None, None]
    z = jnp.einsum("oc,nchw->nohw", params["final_w"], y)
    z = z + params["final_b"][None, :, None, None]
    return z


if __name__ == "__main__":
    key = jax.random.PRNGKey(0)
    k_x, k_t, k_p = jax.random.split(key, 3)

    N, C, H, W = 2, 3, 16, 16
    x = jax.random.normal(k_x, (N, C, H, W), jnp.float32)
    t = jax.random.randint(k_t, (N,), 0, 1000).astype(jnp.float32)
    params = init_params(k_p)

    out = modified_model_forward(x, t, params)
    out = jax.block_until_ready(out)

    ref = modified_model_reference(x, t, params)
    assert out.shape == (N, 3, H, W), out.shape
    if not jnp.allclose(out, ref, rtol=1e-4, atol=1e-5):
        max_err = float(jnp.max(jnp.abs(out - ref)))
        raise AssertionError(f"kernel mismatch vs reference, max abs err {max_err}")

    print("KERNEL_OK")
</pallas_src>

<mosaic_0001>
module attributes {stable_mosaic.version = 11 : i64} {
  func.func @kernel(%arg0: i32, %arg1: i32, %arg2: memref<3x3xf32, #tpu.memory_space<smem>>, %arg3: memref<2x3xf32, #tpu.memory_space<smem>>, %arg4: memref<1x3x2x128xf32, #tpu.memory_space<vmem>>, %arg5: memref<1x3x2x128xf32, #tpu.memory_space<vmem>>) attributes {dimension_semantics = [#tpu.dimension_semantics<parallel>, #tpu.dimension_semantics<parallel>], iteration_bounds = array<i64: 2, 1>, scalar_prefetch = 0 : i64, scratch_operands = 0 : i64, tpu.core_type = #tpu.core_type<tc>, window_params = [{transform_indices = @transform_0, window_bounds = array<i64: 3, 3>}, {transform_indices = @transform_1, window_bounds = array<i64: 2, 3>}, {transform_indices = @transform_2, window_bounds = array<i64: 1, 3, 2, 128>}, {transform_indices = @transform_3, window_bounds = array<i64: 1, 3, 2, 128>}]} {
    %c0 = arith.constant 0 : index
    %c0_0 = arith.constant 0 : index
    %c0_1 = arith.constant 0 : index
    %c0_2 = arith.constant 0 : index
    %0 = vector.load %arg4[%c0, %c0_0, %c0_1, %c0_2] : memref<1x3x2x128xf32, #tpu.memory_space<vmem>>, vector<1x1x2x128xf32>
    %1 = vector.shape_cast %0 : vector<1x1x2x128xf32> to vector<2x128xf32>
    %c0_3 = arith.constant 0 : index
    %c0_4 = arith.constant 0 : index
    %2 = memref.load %arg2[%c0_3, %c0_4] : memref<3x3xf32, #tpu.memory_space<smem>>
    %3 = vector.broadcast %2 : f32 to vector<2x128xf32>
    %4 = arith.mulf %1, %3 : vector<2x128xf32>
    %c0_5 = arith.constant 0 : index
    %c1 = arith.constant 1 : index
    %c0_6 = arith.constant 0 : index
    %c0_7 = arith.constant 0 : index
    %5 = vector.load %arg4[%c0_5, %c1, %c0_6, %c0_7] : memref<1x3x2x128xf32, #tpu.memory_space<vmem>>, vector<1x1x2x128xf32>
    %6 = vector.shape_cast %5 : vector<1x1x2x128xf32> to vector<2x128xf32>
    %c0_8 = arith.constant 0 : index
    %c1_9 = arith.constant 1 : index
    %7 = memref.load %arg2[%c0_8, %c1_9] : memref<3x3xf32, #tpu.memory_space<smem>>
    %8 = vector.broadcast %7 : f32 to vector<2x128xf32>
    %9 = arith.mulf %6, %8 : vector<2x128xf32>
    %10 = arith.addf %4, %9 : vector<2x128xf32>
    %c0_10 = arith.constant 0 : index
    %c2 = arith.constant 2 : index
    %c0_11 = arith.constant 0 : index
    %c0_12 = arith.constant 0 : index
    %11 = vector.load %arg4[%c0_10, %c2, %c0_11, %c0_12] : memref<1x3x2x128xf32, #tpu.memory_space<vmem>>, vector<1x1x2x128xf32>
    %12 = vector.shape_cast %11 : vector<1x1x2x128xf32> to vector<2x128xf32>
    %c0_13 = arith.constant 0 : index
    %c2_14 = arith.constant 2 : index
    %13 = memref.load %arg2[%c0_13, %c2_14] : memref<3x3xf32, #tpu.memory_space<smem>>
    %14 = vector.broadcast %13 : f32 to vector<2x128xf32>
    %15 = arith.mulf %12, %14 : vector<2x128xf32>
    %16 = arith.addf %10, %15 : vector<2x128xf32>
    %17 = arith.index_cast %arg0 : i32 to index
    %c0_15 = arith.constant 0 : index
    %18 = memref.load %arg3[%17, %c0_15] : memref<2x3xf32, #tpu.memory_space<smem>>
    %19 = vector.broadcast %18 : f32 to vector<2x128xf32>
    %20 = arith.addf %16, %19 : vector<2x128xf32>
    %c0_16 = arith.constant 0 : index
    %c0_17 = arith.constant 0 : index
    %c0_18 = arith.constant 0 : index
    %c0_19 = arith.constant 0 : index
    %21 = vector.load %arg5[%c0_16, %c0_17, %c0_18, %c0_19] : memref<1x3x2x128xf32, #tpu.memory_space<vmem>>, vector<1x1x2x128xf32>
    %22 = vector.shape_cast %21 : vector<1x1x2x128xf32> to vector<2x128xf32>
    %23 = vector.shape_cast %20 : vector<2x128xf32> to vector<1x1x2x128xf32>
    tpu.vector_store %arg5[%c0_16, %c0_17, %c0_18, %c0_19], %23 {strides = array<i32>} : memref<1x3x2x128xf32, #tpu.memory_space<vmem>>, vector<1x1x2x128xf32>,
    %c0_20 = arith.constant 0 : index
    %c0_21 = arith.constant 0 : index
    %c0_22 = arith.constant 0 : index
    %c0_23 = arith.constant 0 : index
    %24 = vector.load %arg4[%c0_20, %c0_21, %c0_22, %c0_23] : memref<1x3x2x128xf32, #tpu.memory_space<vmem>>, vector<1x1x2x128xf32>
    %25 = vector.shape_cast %24 : vector<1x1x2x128xf32> to vector<2x128xf32>
    %c1_24 = arith.constant 1 : index
    %c0_25 = arith.constant 0 : index
    %26 = memref.load %arg2[%c1_24, %c0_25] : memref<3x3xf32, #tpu.memory_space<smem>>
    %27 = vector.broadcast %26 : f32 to vector<2x128xf32>
    %28 = arith.mulf %25, %27 : vector<2x128xf32>
    %c0_26 = arith.constant 0 : index
    %c1_27 = arith.constant 1 : index
    %c0_28 = arith.constant 0 : index
    %c0_29 = arith.constant 0 : index
    %29 = vector.load %arg4[%c0_26, %c1_27, %c0_28, %c0_29] : memref<1x3x2x128xf32, #tpu.memory_space<vmem>>, vector<1x1x2x128xf32>
    %30 = vector.shape_cast %29 : vector<1x1x2x128xf32> to vector<2x128xf32>
    %c1_30 = arith.constant 1 : index
    %c1_31 = arith.constant 1 : index
    %31 = memref.load %arg2[%c1_30, %c1_31] : memref<3x3xf32, #tpu.memory_space<smem>>
    %32 = vector.broadcast %31 : f32 to vector<2x128xf32>
    %33 = arith.mulf %30, %32 : vector<2x128xf32>
    %34 = arith.addf %28, %33 : vector<2x128xf32>
    %c0_32 = arith.constant 0 : index
    %c2_33 = arith.constant 2 : index
    %c0_34 = arith.constant 0 : index
    %c0_35 = arith.constant 0 : index
    %35 = vector.load %arg4[%c0_32, %c2_33, %c0_34, %c0_35] : memref<1x3x2x128xf32, #tpu.memory_space<vmem>>, vector<1x1x2x128xf32>
    %36 = vector.shape_cast %35 : vector<1x1x2x128xf32> to vector<2x128xf32>
    %c1_36 = arith.constant 1 : index
    %c2_37 = arith.constant 2 : index
    %37 = memref.load %arg2[%c1_36, %c2_37] : memref<3x3xf32, #tpu.memory_space<smem>>
    %38 = vector.broadcast %37 : f32 to vector<2x128xf32>
    %39 = arith.mulf %36, %38 : vector<2x128xf32>
    %40 = arith.addf %34, %39 : vector<2x128xf32>
    %41 = arith.index_cast %arg0 : i32 to index
    %c1_38 = arith.constant 1 : index
    %42 = memref.load %arg3[%41, %c1_38] : memref<2x3xf32, #tpu.memory_space<smem>>
    %43 = vector.broadcast %42 : f32 to vector<2x128xf32>
    %44 = arith.addf %40, %43 : vector<2x128xf32>
    %c0_39 = arith.constant 0 : index
    %c1_40 = arith.constant 1 : index
    %c0_41 = arith.constant 0 : index
    %c0_42 = arith.constant 0 : index
    %45 = vector.load %arg5[%c0_39, %c1_40, %c0_41, %c0_42] : memref<1x3x2x128xf32, #tpu.memory_space<vmem>>, vector<1x1x2x128xf32>
    %46 = vector.shape_cast %45 : vector<1x1x2x128xf32> to vector<2x128xf32>
    %47 = vector.shape_cast %44 : vector<2x128xf32> to vector<1x1x2x128xf32>
    tpu.vector_store %arg5[%c0_39, %c1_40, %c0_41, %c0_42], %47 {strides = array<i32>} : memref<1x3x2x128xf32, #tpu.memory_space<vmem>>, vector<1x1x2x128xf32>,
    %c0_43 = arith.constant 0 : index
    %c0_44 = arith.constant 0 : index
    %c0_45 = arith.constant 0 : index
    %c0_46 = arith.constant 0 : index
    %48 = vector.load %arg4[%c0_43, %c0_44, %c0_45, %c0_46] : memref<1x3x2x128xf32, #tpu.memory_space<vmem>>, vector<1x1x2x128xf32>
    %49 = vector.shape_cast %48 : vector<1x1x2x128xf32> to vector<2x128xf32>
    %c2_47 = arith.constant 2 : index
    %c0_48 = arith.constant 0 : index
    %50 = memref.load %arg2[%c2_47, %c0_48] : memref<3x3xf32, #tpu.memory_space<smem>>
    %51 = vector.broadcast %50 : f32 to vector<2x128xf32>
    %52 = arith.mulf %49, %51 : vector<2x128xf32>
    %c0_49 = arith.constant 0 : index
    %c1_50 = arith.constant 1 : index
    %c0_51 = arith.constant 0 : index
    %c0_52 = arith.constant 0 : index
    %53 = vector.load %arg4[%c0_49, %c1_50, %c0_51, %c0_52] : memref<1x3x2x128xf32, #tpu.memory_space<vmem>>, vector<1x1x2x128xf32>
    %54 = vector.shape_cast %53 : vector<1x1x2x128xf32> to vector<2x128xf32>
    %c2_53 = arith.constant 2 : index
    %c1_54 = arith.constant 1 : index
    %55 = memref.load %arg2[%c2_53, %c1_54] : memref<3x3xf32, #tpu.memory_space<smem>>
    %56 = vector.broadcast %55 : f32 to vector<2x128xf32>
    %57 = arith.mulf %54, %56 : vector<2x128xf32>
    %58 = arith.addf %52, %57 : vector<2x128xf32>
    %c0_55 = arith.constant 0 : index
    %c2_56 = arith.constant 2 : index
    %c0_57 = arith.constant 0 : index
    %c0_58 = arith.constant 0 : index
    %59 = vector.load %arg4[%c0_55, %c2_56, %c0_57, %c0_58] : memref<1x3x2x128xf32, #tpu.memory_space<vmem>>, vector<1x1x2x128xf32>
    %60 = vector.shape_cast %59 : vector<1x1x2x128xf32> to vector<2x128xf32>
    %c2_59 = arith.constant 2 : index
    %c2_60 = arith.constant 2 : index
    %61 = memref.load %arg2[%c2_59, %c2_60] : memref<3x3xf32, #tpu.memory_space<smem>>
    %62 = vector.broadcast %61 : f32 to vector<2x128xf32>
    %63 = arith.mulf %60, %62 : vector<2x128xf32>
    %64 = arith.addf %58, %63 : vector<2x128xf32>
    %65 = arith.index_cast %arg0 : i32 to index
    %c2_61 = arith.constant 2 : index
    %66 = memref.load %arg3[%65, %c2_61] : memref<2x3xf32, #tpu.memory_space<smem>>
    %67 = vector.broadcast %66 : f32 to vector<2x128xf32>
    %68 = arith.addf %64, %67 : vector<2x128xf32>
    %c0_62 = arith.constant 0 : index
    %c2_63 = arith.constant 2 : index
    %c0_64 = arith.constant 0 : index
    %c0_65 = arith.constant 0 : index
    %69 = vector.load %arg5[%c0_62, %c2_63, %c0_64, %c0_65] : memref<1x3x2x128xf32, #tpu.memory_space<vmem>>, vector<1x1x2x128xf32>
    %70 = vector.shape_cast %69 : vector<1x1x2x128xf32> to vector<2x128xf32>
    %71 = vector.shape_cast %68 : vector<2x128xf32> to vector<1x1x2x128xf32>
    tpu.vector_store %arg5[%c0_62, %c2_63, %c0_64, %c0_65], %71 {strides = array<i32>} : memref<1x3x2x128xf32, #tpu.memory_space<vmem>>, vector<1x1x2x128xf32>,
    return
  }
  func.func @transform_0(%arg0: i32, %arg1: i32) -> (i32, i32) {
    %c0_i32 = arith.constant 0 : i32
    %c0_i32_0 = arith.constant 0 : i32
    %c0_i32_1 = arith.constant 0 : i32
    return %c0_i32, %c0_i32_0 : i32, i32
  }
  func.func @transform_1(%arg0: i32, %arg1: i32) -> (i32, i32) {
    %c0_i32 = arith.constant 0 : i32
    %c0_i32_0 = arith.constant 0 : i32
    %c0_i32_1 = arith.constant 0 : i32
    return %c0_i32, %c0_i32_0 : i32, i32
  }
  func.func @transform_2(%arg0: i32, %arg1: i32) -> (i32, i32, i32, i32) {
    %c0_i32 = arith.constant 0 : i32
    %c0_i32_0 = arith.constant 0 : i32
    %c0_i32_1 = arith.constant 0 : i32
    return %arg0, %c0_i32, %arg1, %c0_i32_0 : i32, i32, i32, i32
  }
  func.func @transform_3(%arg0: i32, %arg1: i32) -> (i32, i32, i32, i32) {
    %c0_i32 = arith.constant 0 : i32
    %c0_i32_0 = arith.constant 0 : i32
    %c0_i32_1 = arith.constant 0 : i32
    return %arg0, %c0_i32, %arg1, %c0_i32_0 : i32, i32, i32, i32
  }
}

</mosaic_0001>

<llo_original>
// kernel: modified_model_forward.1
$region0: #{modified_model_forward.1}
  #allocation0 [shape = 'u32[]', space=smem, size = 0x4, offset = 0x4, fixed_abs, tag = 'smem constant byte address 0x4 - core index']
  #allocation1 [shape = 'u32[144,128]{1,0:T(1,128)}', space=vmem, size = 0x12000, scoped, tag = 'internal scratch']
  %s0 = inlined_call_operand.vmem [shape: f32[3,3], index: 0, kind: input, shape index: {}]
  %s1 = inlined_call_operand.vmem [shape: f32[2,3], index: 1, kind: input, shape index: {}]
  %s2 = inlined_call_operand.vmem [shape: f32[2,3,2,128], index: 2, kind: input, shape index: {}]
  %s3 = inlined_call_operand.vmem [shape: f32[2,3,2,128], index: 3, kind: output, shape index: {}]
  %s4 = sld [smem:[#allocation0]]
  $region53: #{modified_model_forward.1} parent=0
    _
  %s6 = ssub.s32 1, %s4
  %s7 = scalar_select 0, %s6, %s4
  $region1: #{modified_model_forward.1} parent=0
    #allocation2 [shape = 'u8[2048]{0}', space=smem, size = 0x800, scoped, tag = 'input window, operand 0, single buffered']
    #allocation3 [shape = 's32[2]{0}', space=sflag, size = 0x8, scoped, tag = 'scoped memory for modified_model_forward.1']
    #allocation4 [shape = 'u8[1024]{0}', space=smem, size = 0x400, scoped, tag = 'input window, operand 1, single buffered']
    #allocation5 [shape = 's32[1]{0}', space=sflag, size = 0x4, scoped, tag = 'scoped memory for modified_model_forward.1']
    %8 = vsyncpa [#allocation3], 0
    %9 = vsyncpa [#allocation5], 0
    loop: start=0, step=1, limit=4
    $region2: #{modified_model_forward.1} parent=1 // loop_pre_header
      _
    $region3: #{modified_model_forward.1} parent=1 // loop_header
      %s11 = sphi 0, %s15
      %p12 = scmp.ge.s32.totalorder %s11, 4
      %s18 = sphi 0, %s30
      %s19 = sphi 0, %s26
      %s20 = sphi 0, %s18
      %s21 = sphi 0, %s19
      %s22 = sphi 0, %s20
      %s23 = sphi 0, %s21
      %s31 = sphi 0, %s31
      %s33 = sphi 0, %s31
      %s34 = sphi 0, %s33
      %s48 = sphi 0, %s34
      %s52 = sphi 0, %s52
      %s54 = sphi 0, %s52
      %s55 = sphi 0, %s54
      %s69 = sphi 0, %s55
      %s77 = sphi 0, %s79
      %s80 = sphi 0, %s77
      %s81 = sphi 0, %s80
      %s97 = sphi 0, %s81
      %s105 = sphi 0, %s107
      %s108 = sphi 0, %s105
      %s109 = sphi 0, %s108
      %s125 = sphi 0, %s109
    $region4: #{modified_model_forward.1} parent=1 // loop_header_branch
      %14 = sbr.rel (%p12) target = $region8
    $region5: #{modified_model_forward.1} parent=1 // loop_body
      %s16 = ssub.s32 %s11, 1
      %s17 = ssub.s32 %s11, 2
      %s24 = sadd.s32 1, %s19
      %p25 = scmp.ge.s32.totalorder %s24, 1
      %s26 = scalar_select %p25, 0, %s24
      %s27 = sadd.s32 1, %s18
      %s28 = scalar_select %p25, %s27, %s18
      %p29 = scmp.ge.s32.totalorder %s28, 2
      %s30 = scalar_select %p29, 0, %s28
      %s32 = sadd.s32 %s31, 1
      %p35 = scmp.eq.s32.totalorder %s11, 1
      %p36 = scmp.ne.s32.totalorder %s31, %s33
      %p37 = scmp.eq.s32.totalorder %s11, 0
      %p38 = por %p36, %p37
      %p39 = scmp.ne.s32.totalorder %s31, %s33
      %p40 = scmp.eq.s32.totalorder %s16, 1
      %p41 = por %p39, %p40
      %p42 = scmp.ne.s32.totalorder %s33, %s34
      %p43 = scmp.eq.s32.totalorder %s16, 0
      %p44 = por %p42, %p43
      %p45 = scmp.ne.s32.totalorder %s33, %s34
      %p46 = scmp.eq.s32.totalorder %s17, 1
      %p47 = por %p45, %p46
      %p49 = scmp.ne.s32.totalorder %s34, %s48
      %p50 = scmp.eq.s32.totalorder %s17, 0
      %p51 = por %p49, %p50
      %s53 = sadd.s32 %s52, 1
      %p56 = scmp.eq.s32.totalorder %s11, 1
      %p57 = scmp.ne.s32.totalorder %s52, %s54
      %p58 = scmp.eq.s32.totalorder %s11, 0
      %p59 = por %p57, %p58
      %p60 = scmp.ne.s32.totalorder %s52, %s54
      %p61 = scmp.eq.s32.totalorder %s16, 1
      %p62 = por %p60, %p61
      %p63 = scmp.ne.s32.totalorder %s54, %s55
      %p64 = scmp.eq.s32.totalorder %s16, 0
      %p65 = por %p63, %p64
      %p66 = scmp.ne.s32.totalorder %s54, %s55
      %p67 = scmp.eq.s32.totalorder %s17, 1
      %p68 = por %p66, %p67
      %p70 = scmp.ne.s32.totalorder %s55, %s69
      %p71 = scmp.eq.s32.totalorder %s17, 0
      %p72 = por %p70, %p71
      %s73 = ssub.s32 %s18, %s30
      %s74 = ssub.s32 %s19, %s26
      %s75 = sor.u32 %s73, %s74
      %p76 = scmp.eq.s32.totalorder %s75, 0
      %s78 = sadd.s32 %s77, 1
      %s79 = scalar_select %p76, %s77, %s78
      %p82 = pneg %p76
      %p83 = scmp.eq.s32.totalorder %s11, 1
      %p84 = por %p82, %p83
      %p85 = scmp.ne.s32.totalorder %s77, %s80
      %p86 = scmp.eq.s32.totalorder %s11, 0
      %p87 = por %p85, %p86
      %p88 = scmp.ne.s32.totalorder %s77, %s80
      %p89 = scmp.eq.s32.totalorder %s16, 1
      %p90 = por %p88, %p89
      %p91 = scmp.ne.s32.totalorder %s80, %s81
      %p92 = scmp.eq.s32.totalorder %s16, 0
      %p93 = por %p91, %p92
      %p94 = scmp.ne.s32.totalorder %s80, %s81
      %p95 = scmp.eq.s32.totalorder %s17, 1
      %p96 = por %p94, %p95
      %p98 = scmp.ne.s32.totalorder %s81, %s97
      %p99 = scmp.eq.s32.totalorder %s17, 0
      %p100 = por %p98, %p99
      %s101 = ssub.s32 %s18, %s30
      %s102 = ssub.s32 %s19, %s26
      %s103 = sor.u32 %s101, %s102
      %p104 = scmp.eq.s32.totalorder %s103, 0
      %s106 = sadd.s32 %s105, 1
      %s107 = scalar_select %p104, %s105, %s106
      %p110 = pneg %p104
      %p111 = scmp.eq.s32.totalorder %s11, 1
      %p112 = por %p110, %p111
      %p113 = scmp.ne.s32.totalorder %s105, %s108
      %p114 = scmp.eq.s32.totalorder %s11, 0
      %p115 = por %p113, %p114
      %p116 = scmp.ne.s32.totalorder %s105, %s108
      %p117 = scmp.eq.s32.totalorder %s16, 1
      %p118 = por %p116, %p117
      %p119 = scmp.ne.s32.totalorder %s108, %s109
      %p120 = scmp.eq.s32.totalorder %s16, 0
      %p121 = por %p119, %p120
      %p122 = scmp.ne.s32.totalorder %s108, %s109
      %p123 = scmp.eq.s32.totalorder %s17, 1
      %p124 = por %p122, %p123
      %p126 = scmp.ne.s32.totalorder %s109, %s125
      %p127 = scmp.eq.s32.totalorder %s17, 0
      %p128 = por %p126, %p127
      %p129 = scmp.le.s32.totalorder 1, %s11
      %p130 = scmp.lt.s32.totalorder %s11, 3
      %p131 = pnand %p129, %p130
      %p132 = pneg %p131
      // Predicated region
      $region9: #{modified_model_forward.1} parent=5 // pred_check
        _
      $region10: #{modified_model_forward.1} parent=5 // pred_check_branch
        %134 = sbr.rel (%p131) target = $region12
      $region11: #{modified_model_forward.1} parent=5 // pred_region
        %s135 = ssub.s32 %s11, 1
        // Predicated region
        $region13: #{modified_model_forward.1} parent=11 // pred_check
          %p136 = pneg %p44
        $region14: #{modified_model_forward.1} parent=11 // pred_check_branch
          %138 = sbr.rel (%p136) target = $region16
        $region15: #{modified_model_forward.1} parent=11 // pred_region
          %s140 = ssub.s32 64, 64
          %141 = vsyncadd [#allocation3], %s140
          %s143 = sshll.u32 %s0, 4
          %s144 = int_to_ptr.vmem [resolvable:$true] %s143
          %146 = dma.vmem_to_smem %s144, 64, [#allocation2], [#allocation3]
        $region16: #{modified_model_forward.1} parent=11 // pred_fallthru
          _
        // Predicated region
        $region17: #{modified_model_forward.1} parent=11 // pred_check
          %p147 = pneg %p65
        $region18: #{modified_model_forward.1} parent=11 // pred_check_branch
          %149 = sbr.rel (%p147) target = $region20
        $region19: #{modified_model_forward.1} parent=11 // pred_region
          %s151 = ssub.s32 32, 32
          %152 = vsyncadd [#allocation5], %s151
          %s154 = sshll.u32 %s1, 4
          %s155 = int_to_ptr.vmem [resolvable:$true] %s154
          %157 = dma.vmem_to_smem %s155, 32, [#allocation4], [#allocation5]
        $region20: #{modified_model_forward.1} parent=11 // pred_fallthru
          _
      $region12: #{modified_model_forward.1} parent=5 // pred_fallthru
        _
      %p158 = scmp.lt.s32.totalorder %s11, 2
      // Predicated region
      $region21: #{modified_model_forward.1} parent=5 // pred_check
        %p159 = pneg %p158
      $region22: #{modified_model_forward.1} parent=5 // pred_check_branch
        %161 = sbr.rel (%p159) target = $region24
      $region23: #{modified_model_forward.1} parent=5 // pred_region
        // Predicated region
        $region25: #{modified_model_forward.1} parent=23 // pred_check
          %p162 = pneg %p87
        $region26: #{modified_model_forward.1} parent=23 // pred_check_branch
          %164 = sbr.rel (%p162) target = $region28
        $region27: #{modified_model_forward.1} parent=23 // pred_region
          %p165 = scmp.lt.s32.totalorder %s18, 1
          %s166 = scalar_select %p165, %s18, 1
          %p167 = scmp.lt.s32.totalorder %s19, 0
          %s168 = scalar_select %p167, %s19, 0
          %s169 = smul.addr %s166, 3
          %s170 = sadd.s32 %s168, %s169
          %s171 = smul.addr %s170, 2
          %s172 = scalar_lea.vmem %s2, %s171
        $region28: #{modified_model_forward.1} parent=23 // pred_fallthru
          _
      $region24: #{modified_model_forward.1} parent=5 // pred_fallthru
        _
      %p173 = scmp.le.s32.totalorder 1, %s11
      %p174 = scmp.lt.s32.totalorder %s11, 3
      %p175 = pnand %p173, %p174
      %p176 = pneg %p175
      // Predicated region
      $region29: #{modified_model_forward.1} parent=5 // pred_check
        _
      $region30: #{modified_model_forward.1} parent=5 // pred_check_branch
        %178 = sbr.rel (%p175) target = $region32
      $region31: #{modified_model_forward.1} parent=5 // pred_region
        %s179 = ssub.s32 %s11, 1
        // Predicated region
        $region33: #{modified_model_forward.1} parent=31 // pred_check
          %p180 = pneg %p44
        $region34: #{modified_model_forward.1} parent=31 // pred_check_branch
          %182 = sbr.rel (%p180) target = $region36
        $region35: #{modified_model_forward.1} parent=31 // pred_region
          %183 = dma.done [#allocation3], 64
        $region36: #{modified_model_forward.1} parent=31 // pred_fallthru
          _
        // Predicated region
        $region37: #{modified_model_forward.1} parent=31 // pred_check
          %p184 = pneg %p65
        $region38: #{modified_model_forward.1} parent=31 // pred_check_branch
          %186 = sbr.rel (%p184) target = $region40
        $region39: #{modified_model_forward.1} parent=31 // pred_region
          %187 = dma.done [#allocation5], 32
        $region40: #{modified_model_forward.1} parent=31 // pred_fallthru
          _
        %188 = sfence
        %p189 = pneg %p44
        %p190 = pneg %p41
        %p191 = pneg %p65
        %p192 = pneg %p62
        %p193 = scmp.lt.s32.totalorder %s20, 1
        %s194 = scalar_select %p193, %s20, 1
        %p195 = scmp.lt.s32.totalorder %s21, 0
        %s196 = scalar_select %p195, %s21, 0
        %s197 = smul.addr %s194, 3
        %s198 = sadd.s32 %s196, %s197
        %s199 = smul.addr %s198, 2
        %s200 = scalar_lea.vmem %s2, %s199
        %p201 = pneg %p93
        %p202 = pneg %p90
        %p203 = pneg %p121
        %p204 = pneg %p118
        %p205 = scmp.lt.s32.totalorder %s20, 1
        %s206 = scalar_select %p205, %s20, 1
        %p207 = scmp.lt.s32.totalorder %s21, 0
        %s208 = scalar_select %p207, %s21, 0
        %s209 = smul.addr %s206, 3
        %s210 = sadd.s32 %s208, %s209
        %s211 = smul.addr %s210, 2
        %s212 = scalar_lea.vmem %s3, %s211
        %p213 = scmp.lt.s32.totalorder %s20, 1
        %s214 = scalar_select %p213, %s20, 1
        %p215 = scmp.lt.s32.totalorder %s21, 0
        %s216 = scalar_select %p215, %s21, 0
        %s217 = smul.addr %s214, 3
        %s218 = sadd.s32 %s216, %s217
        %s219 = smul.addr %s218, 2
        %s220 = scalar_lea.vmem %s2, %s219
        %p221 = scmp.lt.s32.totalorder %s20, 1
        %s222 = scalar_select %p221, %s20, 1
        %p223 = scmp.lt.s32.totalorder %s21, 0
        %s224 = scalar_select %p223, %s21, 0
        %s225 = smul.addr %s222, 3
        %s226 = sadd.s32 %s224, %s225
        %s227 = smul.addr %s226, 2
        %s228 = scalar_lea.vmem %s3, %s227
        %v229 = vld [vmem:[%s220] sm:$0x3]
        %s230 = sld [smem:[#allocation2]]
        %v231 = vstv %s230
        %v232 = vmul.f32 %v229, %v231
        %s233 = scalar_lea.vmem %s220, 2
        %v234 = vld [vmem:[%s233] sm:$0x3]
        %s235 = sld [smem:[#allocation2 + $0x1]]
        %v236 = vstv %s235
        %v237 = vmul.f32 %v234, %v236
        %v238 = vadd.f32 %v232, %v237
        %s239 = scalar_lea.vmem %s220, 4
        %v240 = vld [vmem:[%s239] sm:$0x3]
        %s241 = sld [smem:[#allocation2 + $0x2]]
        %v242 = vstv %s241
        %v243 = vmul.f32 %v240, %v242
        %v244 = vadd.f32 %v238, %v243
        %s245 = smul.u32 %s20, 128
        %s246 = sld [smem:[#allocation4 + %s245]]
        %v247 = vstv %s246
        %v248 = vadd.f32 %v244, %v247
        %249 = vst [vmem:[%s228] sm:$0x3] %v248
        %v250 = vld [vmem:[%s220] sm:$0x3]
        %s251 = sld [smem:[#allocation2 + $0x80]]
        %v252 = vstv %s251
        %v253 = vmul.f32 %v250, %v252
        %v254 = vld [vmem:[%s233] sm:$0x3]
        %s255 = sld [smem:[#allocation2 + $0x81]]
        %v256 = vstv %s255
        %v257 = vmul.f32 %v254, %v256
        %v258 = vadd.f32 %v253, %v257
        %v259 = vld [vmem:[%s239] sm:$0x3]
        %s260 = sld [smem:[#allocation2 + $0x82]]
        %v261 = vstv %s260
        %v262 = vmul.f32 %v259, %v261
        %v263 = vadd.f32 %v258, %v262
        %s264 = sadd.s32 %s245, 1
        %s265 = sld [smem:[#allocation4 + %s264]]
        %v266 = vstv %s265
        %v267 = vadd.f32 %v263, %v266
        %s268 = scalar_lea.vmem %s228, 2
        %269 = vst [vmem:[%s268] sm:$0x3] %v267
        %v270 = vld [vmem:[%s220] sm:$0x3]
        %s271 = sld [smem:[#allocation2 + $0x100]]
        %v272 = vstv %s271
        %v273 = vmul.f32 %v270, %v272
        %v274 = vld [vmem:[%s233] sm:$0x3]
        %s275 = sld [smem:[#allocation2 + $0x101]]
        %v276 = vstv %s275
        %v277 = vmul.f32 %v274, %v276
        %v278 = vadd.f32 %v273, %v277
        %v279 = vld [vmem:[%s239] sm:$0x3]
        %s280 = sld [smem:[#allocation2 + $0x102]]
        %v281 = vstv %s280
        %v282 = vmul.f32 %v279, %v281
        %v283 = vadd.f32 %v278, %v282
        %s284 = sadd.s32 %s245, 2
        %s285 = sld [smem:[#allocation4 + %s284]]
        %v286 = vstv %s285
        %v287 = vadd.f32 %v283, %v286
        %s288 = scalar_lea.vmem %s228, 4
        %289 = vst [vmem:[%s288] sm:$0x3] %v287
        %p290 = scmp.lt.s32.totalorder %s20, 1
        %s291 = scalar_select %p290, %s20, 1
        %p292 = scmp.lt.s32.totalorder %s21, 0
        %s293 = scalar_select %p292, %s21, 0
        %s294 = smul.addr %s291, 3
        %s295 = sadd.s32 %s293, %s294
        %s296 = smul.addr %s295, 2
        %s297 = scalar_lea.vmem %s3, %s296
        // Predicated region
        $region41: #{modified_model_forward.1} parent=31 // pred_check
          %p298 = pneg %p118
        $region42: #{modified_model_forward.1} parent=31 // pred_check_branch
          %300 = sbr.rel (%p298) target = $region44
        $region43: #{modified_model_forward.1} parent=31 // pred_region
          _
        $region44: #{modified_model_forward.1} parent=31 // pred_fallthru
          _
      $region32: #{modified_model_forward.1} parent=5 // pred_fallthru
        _
      %p301 = scmp.le.s32.totalorder 2, %s11
      // Predicated region
      $region45: #{modified_model_forward.1} parent=5 // pred_check
        %p302 = pneg %p301
      $region46: #{modified_model_forward.1} parent=5 // pred_check_branch
        %304 = sbr.rel (%p302) target = $region48
      $region47: #{modified_model_forward.1} parent=5 // pred_region
        %s305 = ssub.s32 %s11, 2
        // Predicated region
        $region49: #{modified_model_forward.1} parent=47 // pred_check
          %p306 = pneg %p124
        $region50: #{modified_model_forward.1} parent=47 // pred_check_branch
          %308 = sbr.rel (%p306) target = $region52
        $region51: #{modified_model_forward.1} parent=47 // pred_region
          %p309 = scmp.lt.s32.totalorder %s22, 1
          %s310 = scalar_select %p309, %s22, 1
          %p311 = scmp.lt.s32.totalorder %s23, 0
          %s312 = scalar_select %p311, %s23, 0
          %s313 = smul.addr %s310, 3
          %s314 = sadd.s32 %s312, %s313
          %s315 = smul.addr %s314, 2
          %s316 = scalar_lea.vmem %s3, %s315
        $region52: #{modified_model_forward.1} parent=47 // pred_fallthru
          _
      $region48: #{modified_model_forward.1} parent=5 // pred_fallthru
        _
    $region6: #{modified_model_forward.1} parent=1 // loop_footer
      %s15 = sadd.s32 1, %s11
    $region7: #{modified_model_forward.1} parent=1 // loop_footer_branch
      %10 = sbr.rel target = $region3
    $region8: #{modified_model_forward.1} parent=1 // loop_exit
      _
    %317 = vsyncpa [#allocation3], 1
    %s318 = scalar_lea.sflag [#allocation3], 1
    %319 = vsyncpa %s318, 1
    %320 = vsyncpa [#allocation5], 1

</llo_original>
